<compile_context>
chip_gen: v7x
topology: tpu7x:2x2x1
jax: 0.10.0
libtpu: 0.0.40
codegen_flags: <defaults>
</compile_context>

<pallas_src>
import functools

import jax
import jax.numpy as jnp
from jax.experimental import pallas as pl
from jax.experimental.pallas import tpu as pltpu

LANE = 128
SUB = 16                      # bf16 sublane pack
TB_MAX = 2048                 # largest batch tile (rows)
_TB_BUCKETS = (16, 32, 64, 128, 256, 512, 1024, 2048)
PALLAS_MIN_BATCH = 64         # below this, the plain-XLA path is cheaper than a launch


def _round_up(x, m):
    return (x + m - 1) // m * m


def _choose_tb(batch):
    """Bucketed batch tile; >=2 grid steps once there is enough work so the
    'parallel' grid axis can shard across v7x's two TensorCores."""
    bp = _round_up(batch, SUB)
    target = bp if bp <= SUB else _round_up((bp + 1) // 2, SUB)
    tb = TB_MAX
    for b in _TB_BUCKETS:
        if b >= target:
            tb = b
            break
    return tb, _round_up(bp, tb)


# ----------------------------------------------------------------------------
# Pallas kernel: in-kernel embedder (one-hot @ folded table) + fused 3-layer
# MLP (eval-mode BatchNorm folded into weights/biases).  Matmul operands bf16,
# accumulation / bias / ReLU in f32, narrow bf16 output.
# ----------------------------------------------------------------------------
def _make_kernel(n_cat, cdp):
    def kernel(xnum_ref, xcat_ref, w1n_ref, w1c_ref, b1_ref,
               w2_ref, b2_ref, w3_ref, b3_ref, o_ref):
        # ---- embedder + fc1 (BN folded) ------------------------------------
        xn = xnum_ref[...].astype(jnp.bfloat16)                 # (TB, n_num_p)
        h1 = jnp.dot(xn, w1n_ref[...], preferred_element_type=jnp.float32)
        ids = xcat_ref[...]                                     # (TB, n_cat) i32
        iota = jax.lax.broadcasted_iota(jnp.int32, (ids.shape[0], cdp), 1)
        for j in range(n_cat):                                  # static unroll
            onehot = (ids[:, j:j + 1] == iota).astype(jnp.bfloat16)
            h1 = h1 + jnp.dot(onehot, w1c_ref[j],
                              preferred_element_type=jnp.float32)
        h1 = jnp.maximum(h1 + b1_ref[...], 0.0).astype(jnp.bfloat16)

        # ---- fc2 (BN folded) + ReLU ----------------------------------------
        h2 = jnp.dot(h1, w2_ref[...], preferred_element_type=jnp.float32) + b2_ref[...]
        h2 = jnp.maximum(h2, 0.0).astype(jnp.bfloat16)

        # ---- final mapping: narrow bf16 output (only valid columns) --------
        o_ref[...] = (jnp.dot(h2, w3_ref[...], preferred_element_type=jnp.float32)
                      + b3_ref[...]).astype(o_ref.dtype)
    return kernel


@functools.partial(jax.jit, static_argnames=("tb", "n_cat", "cdp", "out_cols"))
def _encoder_call(x_num, x_cat, w1n, w1c, b1, w2, b2, w3, b3,
                  *, tb, n_cat, cdp, out_cols):
    batch_p, n_num_p = x_num.shape
    h_p = w1n.shape[1]
    h2_p = w2.shape[1]

    def row_spec(shape):          # activation / output blocks: move along batch
        return pl.BlockSpec(shape, lambda i: (i, 0))

    def fix2(shape):              # weights / biases: VMEM-resident
        return pl.BlockSpec(shape, lambda i: (0, 0))

    def fix3(shape):
        return pl.BlockSpec(shape, lambda i: (0, 0, 0))

    return pl.pallas_call(
        _make_kernel(n_cat, cdp),
        out_shape=jax.ShapeDtypeStruct((batch_p, out_cols), jnp.bfloat16),
        grid=(batch_p // tb,),
        in_specs=[
            row_spec((tb, n_num_p)),              # raw numeric columns (f32)
            row_spec((tb, n_cat)),                # categorical ids (int32)
            fix2((n_num_p, h_p)),                 # numeric rows of fc1 (bf16)
            fix3((n_cat, cdp, h_p)),              # per-column folded table@fc1 (bf16)
            fix2((1, h_p)),                       # fc1 bias (f32, BN folded)
            fix2((h_p, h2_p)), fix2((1, h2_p)),   # fc2
            fix2((h2_p, out_cols)), fix2((1, out_cols)),  # final mapping
        ],
        out_specs=row_spec((tb, out_cols)),
        compiler_params=pltpu.CompilerParams(
            dimension_semantics=("parallel",)),
    )(x_num, x_cat, w1n, w1c, b1, w2, b2, w3, b3)


# ----------------------------------------------------------------------------
# Parameters + forward wrapper.
# ----------------------------------------------------------------------------
class TabNetEncoderParams:
    def __init__(self, key, input_size, cat_idxs, cat_dims, cat_emb_dims,
                 encoder_hidden_size=32, output_size=16, bn_eps=1e-5):
        assert len(cat_idxs) >= 1 and input_size > len(cat_idxs)
        self.input_size = input_size
        self.cat_idxs = list(cat_idxs)
        self.cat_dims = list(cat_dims)
        self.cat_emb_dims = list(cat_emb_dims)
        self.n_cat = len(cat_idxs)
        self.output_size = output_size
        self.out_features = output_size

        self.n_num = input_size - self.n_cat
        mlp_in = self.n_num + sum(cat_emb_dims)
        h, h2 = encoder_hidden_size, encoder_hidden_size // 2
        self.mlp_in = mlp_in

        keys = jax.random.split(key, 8)

        # Embedding tables (one per categorical column)
        self.emb_tables = [
            jax.random.normal(keys[i], (cat_dims[i], cat_emb_dims[i]),
                              jnp.float32) * 0.1
            for i in range(self.n_cat)
        ]

        def linear(k, fan_in, fan_out):
            lim = 1.0 / jnp.sqrt(fan_in)
            kw, kb = jax.random.split(k)
            w = jax.random.uniform(kw, (fan_in, fan_out), jnp.float32, -lim, lim)
            b = jax.random.uniform(kb, (1, fan_out), jnp.float32, -lim, lim)
            return w, b

        w1, b1 = linear(keys[3], mlp_in, h)
        w2, b2 = linear(keys[4], h, h2)
        w3, b3 = linear(keys[5], h2, output_size)

        # Fold eval-mode BatchNorm into the Linear weights/biases:
        #   y = s*(xW + b) + t,  s = gamma/sqrt(var+eps),  t = beta - mean*s.
        # TODO(synk): pass trained running stats / affine params here if loaded.
        def fold_bn(w, b, gamma, beta, mean, var):
            s = gamma / jnp.sqrt(var + bn_eps)
            return w * s, b * s + (beta - mean * s)

        ones1, zeros1 = jnp.ones((1, h), jnp.float32), jnp.zeros((1, h), jnp.float32)
        ones2, zeros2 = jnp.ones((1, h2), jnp.float32), jnp.zeros((1, h2), jnp.float32)
        w1, b1 = fold_bn(w1, b1, ones1, zeros1, zeros1, ones1)
        w2, b2 = fold_bn(w2, b2, ones2, zeros2, zeros2, ones2)

        # f32 unpadded copies (fallback / reference path)
        self.w1_f, self.b1_f = w1, b1
        self.w2_f, self.b2_f = w2, b2
        self.w3_f, self.b3_f = w3, b3

        # ------------------ kernel-side packed parameters -------------------
        h_p = _round_up(h, LANE)
        h2_p = _round_up(h2, LANE)
        self.n_num_p = _round_up(self.n_num, SUB)
        self.cdp = _round_up(max(cat_dims), SUB)     # one-hot width (K of cat dots)

        def pad2(a, rows, cols):
            return jnp.pad(a, ((0, rows - a.shape[0]), (0, cols - a.shape[1])))

        # Fold each embedding table into its fc1 rows:  emb_j @ W1_rows_j.
        w1c_list, off = [], 0
        for j in range(self.n_cat):
            rows = w1[off:off + cat_emb_dims[j], :]              # (emb_dim_j, h)
            folded = self.emb_tables[j] @ rows                   # (cat_dim_j, h)
            w1c_list.append(pad2(folded, self.cdp, h_p))
            off += cat_emb_dims[j]
        self.w1c = jnp.stack(w1c_list).astype(jnp.bfloat16)      # (n_cat, cdp, h_p)
        self.w1n = pad2(w1[off:off + self.n_num, :],
                        self.n_num_p, h_p).astype(jnp.bfloat16)  # (n_num_p, h_p)
        self.b1 = pad2(b1, 1, h_p).astype(jnp.float32)

        self.w2 = pad2(w2, h_p, h2_p).astype(jnp.bfloat16)
        self.b2 = pad2(b2, 1, h2_p).astype(jnp.float32)
        self.w3 = pad2(w3, h2_p, output_size).astype(jnp.bfloat16)  # narrow out cols
        self.b3 = b3.astype(jnp.float32)                             # (1, output_size)

        num_idxs = [i for i in range(input_size) if i not in self.cat_idxs]
        self._cat_cols = jnp.array(self.cat_idxs, jnp.int32)
        self._num_cols = jnp.array(num_idxs, jnp.int32)
        self._cat_max = jnp.array([d - 1 for d in cat_dims], jnp.int32)

    # -------------------- plain-XLA path (fallback / reference) -------------
    def _xla_forward(self, ids, x_num):
        embs = [jnp.take(self.emb_tables[j], ids[:, j], axis=0)
                for j in range(self.n_cat)]
        xc = jnp.concatenate(embs + [x_num], axis=1)
        h1 = jax.nn.relu(xc @ self.w1_f + self.b1_f)
        h2 = jax.nn.relu(h1 @ self.w2_f + self.b2_f)
        return h2 @ self.w3_f + self.b3_f

    # -------------------- public forward -------------------------------------
    def forward(self, x, use_pallas=None):
        batch = x.shape[0]
        if use_pallas is None:
            use_pallas = batch >= PALLAS_MIN_BATCH

        ids = jnp.clip(x[:, self._cat_cols].astype(jnp.int32), 0, self._cat_max)
        x_num = x[:, self._num_cols]

        if not use_pallas:
            return self._xla_forward(ids, x_num)

        tb, batch_p = _choose_tb(batch)
        pad_r = batch_p - batch
        x_num_p = jnp.pad(x_num, ((0, pad_r), (0, self.n_num_p - self.n_num)))
        ids_p = jnp.pad(ids, ((0, pad_r), (0, 0)))

        out = _encoder_call(x_num_p, ids_p, self.w1n, self.w1c, self.b1,
                            self.w2, self.b2, self.w3, self.b3,
                            tb=tb, n_cat=self.n_cat, cdp=self.cdp,
                            out_cols=self.output_size)
        if pad_r:
            out = out[:batch]
        return out.astype(jnp.float32)


# ----------------------------------------------------------------------------
if __name__ == "__main__":
    key = jax.random.PRNGKey(0)
    k_param, k_num, k_cat = jax.random.split(key, 3)

    # Small shapes consistent with the module
    batch = 8
    input_size = 8
    cat_idxs = [0, 1]
    cat_dims = [5, 7]
    cat_emb_dims = [3, 4]
    encoder_hidden_size = 32
    output_size = 16

    params = TabNetEncoderParams(k_param, input_size, cat_idxs, cat_dims,
                                 cat_emb_dims,
                                 encoder_hidden_size=encoder_hidden_size,
                                 output_size=output_size)

    def make_x(kn, kc, b):
        x_num_part = jax.random.normal(kn, (b, input_size - len(cat_idxs)),
                                       jnp.float32)
        cat0 = jax.random.randint(kc, (b, 1), 0, cat_dims[0]).astype(jnp.float32)
        cat1 = jax.random.randint(jax.random.fold_in(kc, 1), (b, 1), 0,
                                  cat_dims[1]).astype(jnp.float32)
        return jnp.concatenate([cat0, cat1, x_num_part], axis=1)

    # Small batch: force the Pallas path and cross-check against the XLA reference.
    x_small = make_x(k_num, k_cat, batch)
    out_pallas = params.forward(x_small, use_pallas=True)
    out_ref = params.forward(x_small, use_pallas=False)
    jax.block_until_ready((out_pallas, out_ref))
    assert out_pallas.shape == (batch, output_size), out_pallas.shape
    assert bool(jnp.all(jnp.isfinite(out_pallas)))
    assert bool(jnp.allclose(out_pallas, out_ref, atol=5e-2, rtol=5e-2)), \
        float(jnp.max(jnp.abs(out_pallas - out_ref)))

    # Odd-sized larger batch: exercises batch padding + the 2-step parallel grid.
    batch2 = 200
    x_big = make_x(jax.random.fold_in(k_num, 7), jax.random.fold_in(k_cat, 7), batch2)
    out2 = params.forward(x_big)                       # default: Pallas path
    ref2 = params.forward(x_big, use_pallas=False)
    jax.block_until_ready((out2, ref2))
    assert out2.shape == (batch2, output_size), out2.shape
    assert bool(jnp.allclose(out2, ref2, atol=5e-2, rtol=5e-2))

    print("KERNEL_OK")
</pallas_src>

<mosaic_0001>
module attributes {stable_mosaic.version = 11 : i64} {
  func.func @kernel(%arg0: i32, %arg1: memref<16x16xf32, #tpu.memory_space<vmem>>, %arg2: memref<16x2xi32, #tpu.memory_space<vmem>>, %arg3: memref<16x128xbf16, #tpu.memory_space<vmem>>, %arg4: memref<2x16x128xbf16, #tpu.memory_space<vmem>>, %arg5: memref<1x128xf32, #tpu.memory_space<vmem>>, %arg6: memref<128x128xbf16, #tpu.memory_space<vmem>>, %arg7: memref<1x128xf32, #tpu.memory_space<vmem>>, %arg8: memref<128x16xbf16, #tpu.memory_space<vmem>>, %arg9: memref<1x16xf32, #tpu.memory_space<vmem>>, %arg10: memref<16x16xbf16, #tpu.memory_space<vmem>>) attributes {dimension_semantics = [#tpu.dimension_semantics<parallel>], iteration_bounds = array<i64: 1>, scalar_prefetch = 0 : i64, scratch_operands = 0 : i64, tpu.core_type = #tpu.core_type<tc>, window_params = [{transform_indices = @transform_0, window_bounds = array<i64: 16, 16>}, {transform_indices = @transform_1, window_bounds = array<i64: 16, 2>}, {pipeline_mode = #tpu.pipeline_mode<synchronous>, transform_indices = @transform_2, window_bounds = array<i64: 16, 128>}, {pipeline_mode = #tpu.pipeline_mode<synchronous>, transform_indices = @transform_3, window_bounds = array<i64: 2, 16, 128>}, {pipeline_mode = #tpu.pipeline_mode<synchronous>, transform_indices = @transform_4, window_bounds = array<i64: 1, 128>}, {pipeline_mode = #tpu.pipeline_mode<synchronous>, transform_indices = @transform_5, window_bounds = array<i64: 128, 128>}, {pipeline_mode = #tpu.pipeline_mode<synchronous>, transform_indices = @transform_6, window_bounds = array<i64: 1, 128>}, {pipeline_mode = #tpu.pipeline_mode<synchronous>, transform_indices = @transform_7, window_bounds = array<i64: 128, 16>}, {pipeline_mode = #tpu.pipeline_mode<synchronous>, transform_indices = @transform_8, window_bounds = array<i64: 1, 16>}, {transform_indices = @transform_9, window_bounds = array<i64: 16, 16>}]} {
    %c0 = arith.constant 0 : index
    %c0_0 = arith.constant 0 : index
    %0 = vector.load %arg1[%c0, %c0_0] : memref<16x16xf32, #tpu.memory_space<vmem>>, vector<16x16xf32>
    %1 = arith.truncf %0 : vector<16x16xf32> to vector<16x16xbf16>
    %c0_1 = arith.constant 0 : index
    %c0_2 = arith.constant 0 : index
    %2 = vector.load %arg3[%c0_1, %c0_2] : memref<16x128xbf16, #tpu.memory_space<vmem>>, vector<16x128xbf16>
    %cst = arith.constant dense<0.000000e+00> : vector<16x128xf32>
    %3 = tpu.matmul %1, %2, %cst {dimension_numbers = #tpu.dot_dimension_numbers<[1], [0], [0], [1], [0, 0, 1, 1], [], []>} : vector<16x16xbf16>, vector<16x128xbf16>, vector<16x128xf32> -> vector<16x128xf32>
    %c0_3 = arith.constant 0 : index
    %c0_4 = arith.constant 0 : index
    %4 = vector.load %arg2[%c0_3, %c0_4] : memref<16x2xi32, #tpu.memory_space<vmem>>, vector<16x2xi32>
    %5 = tpu.iota {dimensions = array<i32: 1>} : vector<16x16xi32>
    %6 = vector.extract_strided_slice %4 {offsets = [0, 0], sizes = [16, 1], strides = [1, 1]} : vector<16x2xi32> to vector<16x1xi32>
    %7 = vector.broadcast %6 : vector<16x1xi32> to vector<16x16xi32>
    %8 = arith.cmpi eq, %7, %5 : vector<16x16xi32>
    %9 = arith.extui %8 : vector<16x16xi1> to vector<16x16xi32>
    %10 = arith.sitofp %9 : vector<16x16xi32> to vector<16x16xf32>
    %11 = arith.truncf %10 : vector<16x16xf32> to vector<16x16xbf16>
    %c0_5 = arith.constant 0 : index
    %c0_6 = arith.constant 0 : index
    %c0_7 = arith.constant 0 : index
    %12 = vector.load %arg4[%c0_5, %c0_6, %c0_7] : memref<2x16x128xbf16, #tpu.memory_space<vmem>>, vector<1x16x128xbf16>
    %13 = vector.shape_cast %12 : vector<1x16x128xbf16> to vector<16x128xbf16>
    %cst_8 = arith.constant dense<0.000000e+00> : vector<16x128xf32>
    %14 = tpu.matmul %11, %13, %cst_8 {dimension_numbers = #tpu.dot_dimension_numbers<[1], [0], [0], [1], [0, 0, 1, 1], [], []>} : vector<16x16xbf16>, vector<16x128xbf16>, vector<16x128xf32> -> vector<16x128xf32>
    %15 = arith.addf %3, %14 : vector<16x128xf32>
    %16 = vector.extract_strided_slice %4 {offsets = [0, 1], sizes = [16, 1], strides = [1, 1]} : vector<16x2xi32> to vector<16x1xi32>
    %17 = vector.broadcast %16 : vector<16x1xi32> to vector<16x16xi32>
    %18 = arith.cmpi eq, %17, %5 : vector<16x16xi32>
    %19 = arith.extui %18 : vector<16x16xi1> to vector<16x16xi32>
    %20 = arith.sitofp %19 : vector<16x16xi32> to vector<16x16xf32>
    %21 = arith.truncf %20 : vector<16x16xf32> to vector<16x16xbf16>
    %c1 = arith.constant 1 : index
    %c0_9 = arith.constant 0 : index
    %c0_10 = arith.constant 0 : index
    %22 = vector.load %arg4[%c1, %c0_9, %c0_10] : memref<2x16x128xbf16, #tpu.memory_space<vmem>>, vector<1x16x128xbf16>
    %23 = vector.shape_cast %22 : vector<1x16x128xbf16> to vector<16x128xbf16>
    %cst_11 = arith.constant dense<0.000000e+00> : vector<16x128xf32>
    %24 = tpu.matmul %21, %23, %cst_11 {dimension_numbers = #tpu.dot_dimension_numbers<[1], [0], [0], [1], [0, 0, 1, 1], [], []>} : vector<16x16xbf16>, vector<16x128xbf16>, vector<16x128xf32> -> vector<16x128xf32>
    %25 = arith.addf %15, %24 : vector<16x128xf32>
    %c0_12 = arith.constant 0 : index
    %c0_13 = arith.constant 0 : index
    %26 = vector.load %arg5[%c0_12, %c0_13] : memref<1x128xf32, #tpu.memory_space<vmem>>, vector<1x128xf32>
    %27 = vector.broadcast %26 : vector<1x128xf32> to vector<16x128xf32>
    %28 = arith.addf %25, %27 : vector<16x128xf32>
    %cst_14 = arith.constant 0.000000e+00 : f32
    %29 = vector.broadcast %cst_14 : f32 to vector<16x128xf32>
    %30 = arith.maximumf %28, %29 : vector<16x128xf32>
    %31 = arith.truncf %30 : vector<16x128xf32> to vector<16x128xbf16>
    %c0_15 = arith.constant 0 : index
    %c0_16 = arith.constant 0 : index
    %32 = vector.load %arg6[%c0_15, %c0_16] : memref<128x128xbf16, #tpu.memory_space<vmem>>, vector<128x128xbf16>
    %cst_17 = arith.constant dense<0.000000e+00> : vector<16x128xf32>
    %33 = tpu.matmul %31, %32, %cst_17 {dimension_numbers = #tpu.dot_dimension_numbers<[1], [0], [0], [1], [0, 0, 1, 1], [], []>} : vector<16x128xbf16>, vector<128x128xbf16>, vector<16x128xf32> -> vector<16x128xf32>
    %c0_18 = arith.constant 0 : index
    %c0_19 = arith.constant 0 : index
    %34 = vector.load %arg7[%c0_18, %c0_19] : memref<1x128xf32, #tpu.memory_space<vmem>>, vector<1x128xf32>
    %35 = vector.broadcast %34 : vector<1x128xf32> to vector<16x128xf32>
    %36 = arith.addf %33, %35 : vector<16x128xf32>
    %cst_20 = arith.constant 0.000000e+00 : f32
    %37 = vector.broadcast %cst_20 : f32 to vector<16x128xf32>
    %38 = arith.maximumf %36, %37 : vector<16x128xf32>
    %39 = arith.truncf %38 : vector<16x128xf32> to vector<16x128xbf16>
    %c0_21 = arith.constant 0 : index
    %c0_22 = arith.constant 0 : index
    %40 = vector.load %arg8[%c0_21, %c0_22] : memref<128x16xbf16, #tpu.memory_space<vmem>>, vector<128x16xbf16>
    %cst_23 = arith.constant dense<0.000000e+00> : vector<16x16xf32>
    %41 = tpu.matmul %39, %40, %cst_23 {dimension_numbers = #tpu.dot_dimension_numbers<[1], [0], [0], [1], [0, 0, 1, 1], [], []>} : vector<16x128xbf16>, vector<128x16xbf16>, vector<16x16xf32> -> vector<16x16xf32>
    %c0_24 = arith.constant 0 : index
    %c0_25 = arith.constant 0 : index
    %42 = vector.load %arg9[%c0_24, %c0_25] : memref<1x16xf32, #tpu.memory_space<vmem>>, vector<1x16xf32>
    %43 = vector.broadcast %42 : vector<1x16xf32> to vector<16x16xf32>
    %44 = arith.addf %41, %43 : vector<16x16xf32>
    %45 = arith.truncf %44 : vector<16x16xf32> to vector<16x16xbf16>
    %c0_26 = arith.constant 0 : index
    %c0_27 = arith.constant 0 : index
    %46 = vector.load %arg10[%c0_26, %c0_27] : memref<16x16xbf16, #tpu.memory_space<vmem>>, vector<16x16xbf16>
    tpu.vector_store %arg10[%c0_26, %c0_27], %45 {strides = array<i32>} : memref<16x16xbf16, #tpu.memory_space<vmem>>, vector<16x16xbf16>,
    return
  }
  func.func @transform_0(%arg0: i32) -> (i32, i32) {
    %c0_i32 = arith.constant 0 : i32
    %c0_i32_0 = arith.constant 0 : i32
    return %arg0, %c0_i32 : i32, i32
  }
  func.func @transform_1(%arg0: i32) -> (i32, i32) {
    %c0_i32 = arith.constant 0 : i32
    %c0_i32_0 = arith.constant 0 : i32
    return %arg0, %c0_i32 : i32, i32
  }
  func.func @transform_2(%arg0: i32) -> (i32, i32) {
    %c0_i32 = arith.constant 0 : i32
    %c0_i32_0 = arith.constant 0 : i32
    %c0_i32_1 = arith.constant 0 : i32
    return %c0_i32, %c0_i32_0 : i32, i32
  }
  func.func @transform_3(%arg0: i32) -> (i32, i32, i32) {
    %c0_i32 = arith.constant 0 : i32
    %c0_i32_0 = arith.constant 0 : i32
    %c0_i32_1 = arith.constant 0 : i32
    %c0_i32_2 = arith.constant 0 : i32
    return %c0_i32, %c0_i32_0, %c0_i32_1 : i32, i32, i32
  }
  func.func @transform_4(%arg0: i32) -> (i32, i32) {
    %c0_i32 = arith.constant 0 : i32
    %c0_i32_0 = arith.constant 0 : i32
    %c0_i32_1 = arith.constant 0 : i32
    return %c0_i32, %c0_i32_0 : i32, i32
  }
  func.func @transform_5(%arg0: i32) -> (i32, i32) {
    %c0_i32 = arith.constant 0 : i32
    %c0_i32_0 = arith.constant 0 : i32
    %c0_i32_1 = arith.constant 0 : i32
    return %c0_i32, %c0_i32_0 : i32, i32
  }
  func.func @transform_6(%arg0: i32) -> (i32, i32) {
    %c0_i32 = arith.constant 0 : i32
    %c0_i32_0 = arith.constant 0 : i32
    %c0_i32_1 = arith.constant 0 : i32
    return %c0_i32, %c0_i32_0 : i32, i32
  }
  func.func @transform_7(%arg0: i32) -> (i32, i32) {
    %c0_i32 = arith.constant 0 : i32
    %c0_i32_0 = arith.constant 0 : i32
    %c0_i32_1 = arith.constant 0 : i32
    return %c0_i32, %c0_i32_0 : i32, i32
  }
  func.func @transform_8(%arg0: i32) -> (i32, i32) {
    %c0_i32 = arith.constant 0 : i32
    %c0_i32_0 = arith.constant 0 : i32
    %c0_i32_1 = arith.constant 0 : i32
    return %c0_i32, %c0_i32_0 : i32, i32
  }
  func.func @transform_9(%arg0: i32) -> (i32, i32) {
    %c0_i32 = arith.constant 0 : i32
    %c0_i32_0 = arith.constant 0 : i32
    return %arg0, %c0_i32 : i32, i32
  }
}

</mosaic_0001>

<llo_original>
// kernel: _encoder_call.1
$region0: #{_encoder_call.1}
  #allocation0 [shape = 'u32[]', space=smem, size = 0x4, offset = 0x4, fixed_abs, tag = 'smem constant byte address 0x4 - core index']
  #allocation1 [shape = 'u32[144,128]{1,0:T(1,128)}', space=vmem, size = 0x12000, scoped, tag = 'internal scratch']
  %s0 = inlined_call_operand.vmem [shape: f32[16,16], index: 0, kind: input, shape index: {}]
  %s1 = inlined_call_operand.vmem [shape: s32[16,2], index: 1, kind: input, shape index: {}]
  %s2 = inlined_call_operand.vmem [shape: bf16[16,128], index: 2, kind: input, shape index: {}]
  %s3 = inlined_call_operand.vmem [shape: bf16[2,16,128], index: 3, kind: input, shape index: {}]
  %s4 = inlined_call_operand.hbm [shape: f32[1,128], index: 4, kind: input, shape index: {}]
  %s5 = inlined_call_operand.vmem [shape: bf16[128,128], index: 5, kind: input, shape index: {}]
  %s6 = inlined_call_operand.hbm [shape: f32[1,128], index: 6, kind: input, shape index: {}]
  %s7 = inlined_call_operand.vmem [shape: bf16[128,16], index: 7, kind: input, shape index: {}]
  %s8 = inlined_call_operand.vmem [shape: f32[1,16], index: 8, kind: input, shape index: {}]
  %s9 = inlined_call_operand.hbm [shape: bf16[16,16], index: 9, kind: output, shape index: {}]
  %s10 = sld [smem:[#allocation0]]
  $region54: #{_encoder_call.1} parent=0
    _
  %s12 = ssub.s32 1, %s10
  %s13 = scalar_select 0, %s12, %s10
  $region1: #{_encoder_call.1} parent=0
    #allocation2 [shape = 'u8[512]{0}', space=vmem, size = 0x400, scoped, tag = 'input window, operand 4, single buffered']
    #allocation3 [shape = 's32[1]{0}', space=sflag, size = 0x4, scoped, tag = 'scoped memory for _encoder_call.1']
    #allocation4 [shape = 's32[1]{0}', space=sflag, size = 0x4, scoped, tag = 'scoped memory for _encoder_call.1']
    #allocation5 [shape = 'u8[512]{0}', space=vmem, size = 0x400, scoped, tag = 'input window, operand 6, single buffered']
    #allocation6 [shape = 's32[1]{0}', space=sflag, size = 0x4, scoped, tag = 'scoped memory for _encoder_call.1']
    #allocation7 [shape = 'u8[4096]{0}', space=vmem, size = 0x1000, scoped, tag = 'output window, operand 0, single buffered']
    %14 = vsyncpa [#allocation3], 0
    %15 = vsyncpa [#allocation6], 0
    %16 = vsyncpa [#allocation4], 0
    // Predicated region
    $region2: #{_encoder_call.1} parent=1 // pred_check
      _
    $region3: #{_encoder_call.1} parent=1 // pred_check_branch
      %18 = sbr.rel (0) target = $region5
    $region4: #{_encoder_call.1} parent=1 // pred_region
      _
    $region5: #{_encoder_call.1} parent=1 // pred_fallthru
      _
    // Predicated region
    $region6: #{_encoder_call.1} parent=1 // pred_check
      _
    $region7: #{_encoder_call.1} parent=1 // pred_check_branch
      %20 = sbr.rel (0) target = $region9
    $region8: #{_encoder_call.1} parent=1 // pred_region
      _
    $region9: #{_encoder_call.1} parent=1 // pred_fallthru
      _
    // Predicated region
    $region10: #{_encoder_call.1} parent=1 // pred_check
      _
    $region11: #{_encoder_call.1} parent=1 // pred_check_branch
      %22 = sbr.rel (0) target = $region13
    $region12: #{_encoder_call.1} parent=1 // pred_region
      _
    $region13: #{_encoder_call.1} parent=1 // pred_fallthru
      _
    // Predicated region
    $region14: #{_encoder_call.1} parent=1 // pred_check
      _
    $region15: #{_encoder_call.1} parent=1 // pred_check_branch
      %24 = sbr.rel (0) target = $region17
    $region16: #{_encoder_call.1} parent=1 // pred_region
      _
    $region17: #{_encoder_call.1} parent=1 // pred_fallthru
      _
    // Predicated region
    $region18: #{_encoder_call.1} parent=1 // pred_check
      _
    $region19: #{_encoder_call.1} parent=1 // pred_check_branch
      %26 = sbr.rel (0) target = $region21
    $region20: #{_encoder_call.1} parent=1 // pred_region
      %s28 = ssub.s32 16, 16
      %29 = vsyncadd [#allocation3], %s28
      %s31 = sshll.u32 [#allocation2], 4
      %s32 = int_to_ptr.vmem [resolvable:$true] %s31
      %34 = dma.hbm_to_vmem [thread:$0]  %s4, 16, %s32, [#allocation3]
    $region21: #{_encoder_call.1} parent=1 // pred_fallthru
      _
    // Predicated region
    $region22: #{_encoder_call.1} parent=1 // pred_check
      _
    $region23: #{_encoder_call.1} parent=1 // pred_check_branch
      %36 = sbr.rel (0) target = $region25
    $region24: #{_encoder_call.1} parent=1 // pred_region
      _
    $region25: #{_encoder_call.1} parent=1 // pred_fallthru
      _
    // Predicated region
    $region26: #{_encoder_call.1} parent=1 // pred_check
      _
    $region27: #{_encoder_call.1} parent=1 // pred_check_branch
      %38 = sbr.rel (0) target = $region29
    $region28: #{_encoder_call.1} parent=1 // pred_region
      %s40 = ssub.s32 16, 16
      %41 = vsyncadd [#allocation6], %s40
      %s43 = sshll.u32 [#allocation5], 4
      %s44 = int_to_ptr.vmem [resolvable:$true] %s43
      %46 = dma.hbm_to_vmem [thread:$0]  %s6, 16, %s44, [#allocation6]
    $region29: #{_encoder_call.1} parent=1 // pred_fallthru
      _
    // Predicated region
    $region30: #{_encoder_call.1} parent=1 // pred_check
      _
    $region31: #{_encoder_call.1} parent=1 // pred_check_branch
      %48 = sbr.rel (0) target = $region33
    $region32: #{_encoder_call.1} parent=1 // pred_region
      _
    $region33: #{_encoder_call.1} parent=1 // pred_fallthru
      _
    // Predicated region
    $region34: #{_encoder_call.1} parent=1 // pred_check
      _
    $region35: #{_encoder_call.1} parent=1 // pred_check_branch
      %50 = sbr.rel (0) target = $region37
    $region36: #{_encoder_call.1} parent=1 // pred_region
      _
    $region37: #{_encoder_call.1} parent=1 // pred_fallthru
      _
    // Predicated region
    $region38: #{_encoder_call.1} parent=1 // pred_check
      _
    $region39: #{_encoder_call.1} parent=1 // pred_check_branch
      %52 = sbr.rel (0) target = $region41
    $region40: #{_encoder_call.1} parent=1 // pred_region
      %53 = dma.done [#allocation3], 16
    $region41: #{_encoder_call.1} parent=1 // pred_fallthru
      _
    // Predicated region
    $region42: #{_encoder_call.1} parent=1 // pred_check
      _
    $region43: #{_encoder_call.1} parent=1 // pred_check_branch
      %55 = sbr.rel (0) target = $region45
    $region44: #{_encoder_call.1} parent=1 // pred_region
      %56 = dma.done [#allocation6], 16
    $region45: #{_encoder_call.1} parent=1 // pred_fallthru
      _
    %v58 = vld [vmem:[%s0] sm:$0xff]
    %v59 = vld [vmem:[%s0 + $0x8] sm:$0xff]
    %v60 = vpack.c.bf16 %v59, %v58
    %v61 = vld [vmem:[%s2] sm:$0xf]
    %v62 = vld [vmem:[%s2 + $0x4] sm:$0xf]
    %v63 = vld [vmem:[%s1] sm:$0xff]
    %v64 = vld [vmem:[%s1 + $0x8] sm:$0xff]
    %v65 = vlaneseq
    %v66 = vand.u32 %v65, 127
    %67 = vset.pattern.permute.xlu0 0
    %68 = vperm.xlu0 %67, %v63
    %v69 = vpop.permute.xlu0 %68
    %70 = vset.pattern.permute.xlu0 0
    %71 = vperm.xlu0 %70, %v64
    %v72 = vpop.permute.xlu0 %71
    %vm73 = vcmp.eq.s32.totalorder %v69, %v66
    %vm74 = vcmp.eq.s32.totalorder %v72, %v66
    %v75 = vsel %vm73, 1, 0
    %v76 = vsel %vm74, 1, 0
    %v77 = vcvt.s32.f32 %v75
    %v78 = vcvt.s32.f32 %v76
    %v79 = vpack.c.bf16 %v78, %v77
    %v80 = vld [vmem:[%s3] sm:$0xf]
    %v81 = vld [vmem:[%s3 + $0x4] sm:$0xf]
    %v84 = vunpack.c.l.b16 %v80
    %v85 = vunpack.c.l.b16 %v81
    %v86 = vpack.c.b16 %v85, %v84
    %vm88 = vcmask 130048
    %v90 = vsel %vm88, %v79, 0
    %92 = vmatprep.subr.bf16.mxu0 0
    %93 = vmatpush1.bf16.msra.mxu0 %v86
    %94 = vmatprep.subr.bf16.mxu0 0
    %95 = vmatpush1.bf16.msra.mxu0 0
    %96 = vmatprep.subr.bf16.mxu0 0
    %97 = vmatpush1.bf16.msra.mxu0 0
    %98 = vmatprep.subr.bf16.mxu0 0
    %99 = vmatpush1.bf16.msra.mxu0 0
    %100 = vmatprep.subr.bf16.mxu0 0
    %101 = vmatpush1.bf16.msra.mxu0 0
    %102 = vmatprep.subr.bf16.mxu0 0
    %103 = vmatpush1.bf16.msra.mxu0 0
    %104 = vmatprep.subr.bf16.mxu0 0
    %105 = vmatpush1.bf16.msra.mxu0 0
    %106 = vmatprep.subr.bf16.mxu0 0
    %107 = vmatpush1.bf16.msra.mxu0 0
    %108 = vmatprep.subr.bf16.mxu0 0
    %109 = vmatpush1.bf16.msra.mxu0 0
    %110 = vmatprep.subr.bf16.mxu0 0
    %111 = vmatpush1.bf16.msra.mxu0 0
    %112 = vmatprep.subr.bf16.mxu0 0
    %113 = vmatpush1.bf16.msra.mxu0 0
    %114 = vmatprep.subr.bf16.mxu0 0
    %115 = vmatpush1.bf16.msra.mxu0 0
    %116 = vmatprep.subr.bf16.mxu0 0
    %117 = vmatpush1.bf16.msra.mxu0 0
    %118 = vmatprep.subr.bf16.mxu0 0
    %119 = vmatpush1.bf16.msra.mxu0 0
    %120 = vmatprep.subr.bf16.mxu0 0
    %121 = vmatpush1.bf16.msra.mxu0 0
    %122 = vmatprep.subr.bf16.mxu0 0
    %123 = vmatpush1.bf16.msra.mxu0 0
    %124 = vmatprep.mubr.bf16.mxu0 0
    %125 = vmatmul.mubr.bf16.gmra.mrb[0].mxu0 %v90
    %v126 = vpop.f32.mrb[0].mxu0
    %v127 = vadd.f32 0.0, %v126
    %v128 = vpop.f32.mrb[0].mxu0
    %v129 = vpop.f32.mrb[0].mxu0
    %v130 = vadd.f32 0.0, %v129
    %v131 = vpop.f32.mrb[0].mxu0
    %132 = vdwg.mxu0
    %v135 = vunpack.c.l.b16 %v61
    %v136 = vunpack.c.l.b16 %v62
    %v137 = vpack.c.b16 %v136, %v135
    %v140 = vsel %vm88, %v60, 0
    %142 = vmatprep.subr.bf16.mxu0 0
    %143 = vmatpush1.bf16.msra.mxu0 %v137
    %144 = vmatprep.subr.bf16.mxu0 0
    %145 = vmatpush1.bf16.msra.mxu0 0
    %146 = vmatprep.subr.bf16.mxu0 0
    %147 = vmatpush1.bf16.msra.mxu0 0
    %148 = vmatprep.subr.bf16.mxu0 0
    %149 = vmatpush1.bf16.msra.mxu0 0
    %150 = vmatprep.subr.bf16.mxu0 0
    %151 = vmatpush1.bf16.msra.mxu0 0
    %152 = vmatprep.subr.bf16.mxu0 0
    %153 = vmatpush1.bf16.msra.mxu0 0
    %154 = vmatprep.subr.bf16.mxu0 0
    %155 = vmatpush1.bf16.msra.mxu0 0
    %156 = vmatprep.subr.bf16.mxu0 0
    %157 = vmatpush1.bf16.msra.mxu0 0
    %158 = vmatprep.subr.bf16.mxu0 0
    %159 = vmatpush1.bf16.msra.mxu0 0
    %160 = vmatprep.subr.bf16.mxu0 0
    %161 = vmatpush1.bf16.msra.mxu0 0
    %162 = vmatprep.subr.bf16.mxu0 0
    %163 = vmatpush1.bf16.msra.mxu0 0
    %164 = vmatprep.subr.bf16.mxu0 0
    %165 = vmatpush1.bf16.msra.mxu0 0
    %166 = vmatprep.subr.bf16.mxu0 0
    %167 = vmatpush1.bf16.msra.mxu0 0
    %168 = vmatprep.subr.bf16.mxu0 0
    %169 = vmatpush1.bf16.msra.mxu0 0
    %170 = vmatprep.subr.bf16.mxu0 0
    %171 = vmatpush1.bf16.msra.mxu0 0
    %172 = vmatprep.subr.bf16.mxu0 0
    %173 = vmatpush1.bf16.msra.mxu0 0
    %174 = vmatprep.mubr.bf16.mxu0 0
    %175 = vmatmul.mubr.bf16.gmra.mrb[0].mxu0 %v140
    %v176 = vpop.f32.mrb[0].mxu0
    %v177 = vadd.f32 %v127, %v176
    %v178 = vpop.f32.mrb[0].mxu0
    %v179 = vpop.f32.mrb[0].mxu0
    %v180 = vadd.f32 %v130, %v179
    %v181 = vpop.f32.mrb[0].mxu0
    %182 = vdwg.mxu0
    %183 = vset.pattern.permute.xlu0 1
    %184 = vperm.xlu0 %183, %v63
    %v185 = vpop.permute.xlu0 %184
    %186 = vset.pattern.permute.xlu0 1
    %187 = vperm.xlu0 %186, %v64
    %v188 = vpop.permute.xlu0 %187
    %vm189 = vcmp.eq.s32.totalorder %v185, %v66
    %vm190 = vcmp.eq.s32.totalorder %v188, %v66
    %v191 = vsel %vm189, 1, 0
    %v192 = vsel %vm190, 1, 0
    %v193 = vcvt.s32.f32 %v191
    %v194 = vcvt.s32.f32 %v192
    %v195 = vpack.c.bf16 %v194, %v193
    %s196 = scalar_lea.vmem %s3, 8
    %v197 = vld [vmem:[%s196] sm:$0xf]
    %v198 = vld [vmem:[%s196 + $0x4] sm:$0xf]
    %v201 = vunpack.c.l.b16 %v197
    %v202 = vunpack.c.l.b16 %v198
    %v203 = vpack.c.b16 %v202, %v201
    %v206 = vsel %vm88, %v195, 0
    %208 = vmatprep.subr.bf16.mxu0 0
    %209 = vmatpush1.bf16.msra.mxu0 %v203
    %210 = vmatprep.subr.bf16.mxu0 0
    %211 = vmatpush1.bf16.msra.mxu0 0
    %212 = vmatprep.subr.bf16.mxu0 0
    %213 = vmatpush1.bf16.msra.mxu0 0
    %214 = vmatprep.subr.bf16.mxu0 0
    %215 = vmatpush1.bf16.msra.mxu0 0
    %216 = vmatprep.subr.bf16.mxu0 0
    %217 = vmatpush1.bf16.msra.mxu0 0
    %218 = vmatprep.subr.bf16.mxu0 0
    %219 = vmatpush1.bf16.msra.mxu0 0
    %220 = vmatprep.subr.bf16.mxu0 0
    %221 = vmatpush1.bf16.msra.mxu0 0
    %222 = vmatprep.subr.bf16.mxu0 0
    %223 = vmatpush1.bf16.msra.mxu0 0
    %224 = vmatprep.subr.bf16.mxu0 0
    %225 = vmatpush1.bf16.msra.mxu0 0
    %226 = vmatprep.subr.bf16.mxu0 0
    %227 = vmatpush1.bf16.msra.mxu0 0
    %228 = vmatprep.subr.bf16.mxu0 0
    %229 = vmatpush1.bf16.msra.mxu0 0
    %230 = vmatprep.subr.bf16.mxu0 0
    %231 = vmatpush1.bf16.msra.mxu0 0
    %232 = vmatprep.subr.bf16.mxu0 0
    %233 = vmatpush1.bf16.msra.mxu0 0
    %234 = vmatprep.subr.bf16.mxu0 0
    %235 = vmatpush1.bf16.msra.mxu0 0
    %236 = vmatprep.subr.bf16.mxu0 0
    %237 = vmatpush1.bf16.msra.mxu0 0
    %238 = vmatprep.subr.bf16.mxu0 0
    %239 = vmatpush1.bf16.msra.mxu0 0
    %240 = vmatprep.mubr.bf16.mxu0 0
    %241 = vmatmul.mubr.bf16.gmra.mrb[0].mxu0 %v206
    %v242 = vpop.f32.mrb[0].mxu0
    %v243 = vadd.f32 0.0, %v242
    %v244 = vpop.f32.mrb[0].mxu0
    %v245 = vpop.f32.mrb[0].mxu0
    %v246 = vadd.f32 0.0, %v245
    %v247 = vpop.f32.mrb[0].mxu0
    %248 = vdwg.mxu0
    %v249 = vadd.f32 %v177, %v243
    %v250 = vadd.f32 %v180, %v246
    %v251 = vld [vmem:[#allocation2] sm:$0x1]
    %v253 = vlaneseq
    %v254 = vshrl.u32 %v253, 7
    %v255 = vsub.s32 0, %v254
    %v256 = vrot.slane %v251, %v255
    %v258 = vadd.f32 %v249, %v256
    %v259 = vadd.f32 %v250, %v256
    %v260 = vmax.f32 %v258, 0.0
    %v261 = vmax.f32 %v259, 0.0
    %v262 = vpack.c.bf16 %v261, %v260
    %v263 = vld [vmem:[%s5] sm:$0xf]
    %v264 = vld [vmem:[%s5 + $0x4] sm:$0xf]
    %v265 = vld [vmem:[%s5 + $0x8] sm:$0xf]
    %v266 = vld [vmem:[%s5 + $0xc] sm:$0xf]
    %v267 = vld [vmem:[%s5 + $0x10] sm:$0xf]
    %v268 = vld [vmem:[%s5 + $0x14] sm:$0xf]
    %v269 = vld [vmem:[%s5 + $0x18] sm:$0xf]
    %v270 = vld [vmem:[%s5 + $0x1c] sm:$0xf]
    %v271 = vld [vmem:[%s5 + $0x20] sm:$0xf]
    %v272 = vld [vmem:[%s5 + $0x24] sm:$0xf]
    %v273 = vld [vmem:[%s5 + $0x28] sm:$0xf]
    %v274 = vld [vmem:[%s5 + $0x2c] sm:$0xf]
    %v275 = vld [vmem:[%s5 + $0x30] sm:$0xf]
    %v276 = vld [vmem:[%s5 + $0x34] sm:$0xf]
    %v277 = vld [vmem:[%s5 + $0x38] sm:$0xf]
    %v278 = vld [vmem:[%s5 + $0x3c] sm:$0xf]
    %v279 = vld [vmem:[#allocation5] sm:$0x1]
    %v281 = vlaneseq
    %v282 = vshrl.u32 %v281, 7
    %v283 = vsub.s32 0, %v282
    %v284 = vrot.slane %v279, %v283
    %v302 = vunpack.c.l.b16 %v263
    %v303 = vunpack.c.l.b16 %v264
    %v304 = vunpack.c.l.b16 %v265
    %v305 = vunpack.c.l.b16 %v266
    %v306 = vunpack.c.l.b16 %v267
    %v307 = vunpack.c.l.b16 %v268
    %v308 = vunpack.c.l.b16 %v269
    %v309 = vunpack.c.l.b16 %v270
    %v310 = vunpack.c.l.b16 %v271
    %v311 = vunpack.c.l.b16 %v272
    %v312 = vunpack.c.l.b16 %v273
    %v313 = vunpack.c.l.b16 %v274
    %v314 = vunpack.c.l.b16 %v275
    %v315 = vunpack.c.l.b16 %v276
    %v316 = vunpack.c.l.b16 %v277
    %v317 = vunpack.c.l.b16 %v278
    %v318 = vpack.c.b16 %v303, %v302
    %v319 = vpack.c.b16 %v305, %v304
    %v320 = vpack.c.b16 %v307, %v306
    %v321 = vpack.c.b16 %v309, %v308
    %v322 = vpack.c.b16 %v311, %v310
    %v323 = vpack.c.b16 %v313, %v312
    %v324 = vpack.c.b16 %v315, %v314
    %v325 = vpack.c.b16 %v317, %v316
    %334 = vmatprep.subr.bf16.mxu0 0
    %335 = vmatpush1.bf16.msra.mxu0 %v318
    %336 = vmatprep.subr.bf16.mxu0 0
    %337 = vmatpush1.bf16.msra.mxu0 %v319
    %338 = vmatprep.subr.bf16.mxu0 0
    %339 = vmatpush1.bf16.msra.mxu0 %v320
    %340 = vmatprep.subr.bf16.mxu0 0
    %341 = vmatpush1.bf16.msra.mxu0 %v321
    %342 = vmatprep.subr.bf16.mxu0 0
    %343 = vmatpush1.bf16.msra.mxu0 %v322
    %344 = vmatprep.subr.bf16.mxu0 0
    %345 = vmatpush1.bf16.msra.mxu0 %v323
    %346 = vmatprep.subr.bf16.mxu0 0
    %347 = vmatpush1.bf16.msra.mxu0 %v324
    %348 = vmatprep.subr.bf16.mxu0 0
    %349 = vmatpush1.bf16.msra.mxu0 %v325
    %350 = vmatprep.subr.bf16.mxu0 0
    %351 = vmatpush1.bf16.msra.mxu0 0
    %352 = vmatprep.subr.bf16.mxu0 0
    %353 = vmatpush1.bf16.msra.mxu0 0
    %354 = vmatprep.subr.bf16.mxu0 0
    %355 = vmatpush1.bf16.msra.mxu0 0
    %356 = vmatprep.subr.bf16.mxu0 0
    %357 = vmatpush1.bf16.msra.mxu0 0
    %358 = vmatprep.subr.bf16.mxu0 0
    %359 = vmatpush1.bf16.msra.mxu0 0
    %360 = vmatprep.subr.bf16.mxu0 0
    %361 = vmatpush1.bf16.msra.mxu0 0
    %362 = vmatprep.subr.bf16.mxu0 0
    %363 = vmatpush1.bf16.msra.mxu0 0
    %364 = vmatprep.subr.bf16.mxu0 0
    %365 = vmatpush1.bf16.msra.mxu0 0
    %366 = vmatprep.mubr.bf16.mxu0 0
    %367 = vmatmul.mubr.bf16.gmra.mrb[0].mxu0 %v262
    %v368 = vpop.f32.mrb[0].mxu0
    %v369 = vadd.f32 %v284, %v368
    %v370 = vpop.f32.mrb[0].mxu0
    %v371 = vpop.f32.mrb[0].mxu0
    %v372 = vadd.f32 %v284, %v371
    %v373 = vpop.f32.mrb[0].mxu0
    %374 = vdwg.mxu0
    %v375 = vmax.f32 %v369, 0.0
    %v376 = vmax.f32 %v372, 0.0
    %v377 = vpack.c.bf16 %v376, %v375
    %v378 = vld [vmem:[%s7] sm:$0xf]
    %v379 = vld [vmem:[%s7 + $0x4] sm:$0xf]
    %v380 = vld [vmem:[%s7 + $0x8] sm:$0xf]
    %v381 = vld [vmem:[%s7 + $0xc] sm:$0xf]
    %v382 = vld [vmem:[%s7 + $0x10] sm:$0xf]
    %v383 = vld [vmem:[%s7 + $0x14] sm:$0xf]
    %v384 = vld [vmem:[%s7 + $0x18] sm:$0xf]
    %v385 = vld [vmem:[%s7 + $0x1c] sm:$0xf]
    %v386 = vld [vmem:[%s7 + $0x20] sm:$0xf]
    %v387 = vld [vmem:[%s7 + $0x24] sm:$0xf]
    %v388 = vld [vmem:[%s7 + $0x28] sm:$0xf]
    %v389 = vld [vmem:[%s7 + $0x2c] sm:$0xf]
    %v390 = vld [vmem:[%s7 + $0x30] sm:$0xf]
    %v391 = vld [vmem:[%s7 + $0x34] sm:$0xf]
    %v392 = vld [vmem:[%s7 + $0x38] sm:$0xf]
    %v393 = vld [vmem:[%s7 + $0x3c] sm:$0xf]
    %v394 = vld [vmem:[%s8] sm:$0x1]
    %v396 = vlaneseq
    %v397 = vshrl.u32 %v396, 7
    %v398 = vsub.s32 0, %v397
    %v399 = vrot.slane %v394, %v398
    %v417 = vunpack.c.l.b16 %v378
    %v418 = vunpack.c.l.b16 %v379
    %v419 = vunpack.c.l.b16 %v380
    %v420 = vunpack.c.l.b16 %v381
    %v421 = vunpack.c.l.b16 %v382
    %v422 = vunpack.c.l.b16 %v383
    %v423 = vunpack.c.l.b16 %v384
    %v424 = vunpack.c.l.b16 %v385
    %v425 = vunpack.c.l.b16 %v386
    %v426 = vunpack.c.l.b16 %v387
    %v427 = vunpack.c.l.b16 %v388
    %v428 = vunpack.c.l.b16 %v389
    %v429 = vunpack.c.l.b16 %v390
    %v430 = vunpack.c.l.b16 %v391
    %v431 = vunpack.c.l.b16 %v392
    %v432 = vunpack.c.l.b16 %v393
    %v433 = vpack.c.b16 %v418, %v417
    %v434 = vpack.c.b16 %v420, %v419
    %v435 = vpack.c.b16 %v422, %v421
    %v436 = vpack.c.b16 %v424, %v423
    %v437 = vpack.c.b16 %v426, %v425
    %v438 = vpack.c.b16 %v428, %v427
    %v439 = vpack.c.b16 %v430, %v429
    %v440 = vpack.c.b16 %v432, %v431
    %449 = vmatprep.subr.bf16.mxu0 0
    %450 = vmatpush1.bf16.msra.mxu0 %v433
    %451 = vmatprep.subr.bf16.mxu0 0
    %452 = vmatpush1.bf16.msra.mxu0 %v434
    %453 = vmatprep.subr.bf16.mxu0 0
    %454 = vmatpush1.bf16.msra.mxu0 %v435
    %455 = vmatprep.subr.bf16.mxu0 0
    %456 = vmatpush1.bf16.msra.mxu0 %v436
    %457 = vmatprep.subr.bf16.mxu0 0
    %458 = vmatpush1.bf16.msra.mxu0 %v437
    %459 = vmatprep.subr.bf16.mxu0 0
    %460 = vmatpush1.bf16.msra.mxu0 %v438
    %461 = vmatprep.subr.bf16.mxu0 0
    %462 = vmatpush1.bf16.msra.mxu0 %v439
    %463 = vmatprep.subr.bf16.mxu0 0
    %464 = vmatpush1.bf16.msra.mxu0 %v440
    %465 = vmatprep.subr.bf16.mxu0 0
    %466 = vmatpush1.bf16.msra.mxu0 0
    %467 = vmatprep.subr.bf16.mxu0 0
    %468 = vmatpush1.bf16.msra.mxu0 0
    %469 = vmatprep.subr.bf16.mxu0 0
    %470 = vmatpush1.bf16.msra.mxu0 0
    %471 = vmatprep.subr.bf16.mxu0 0
    %472 = vmatpush1.bf16.msra.mxu0 0
    %473 = vmatprep.subr.bf16.mxu0 0
    %474 = vmatpush1.bf16.msra.mxu0 0
    %475 = vmatprep.subr.bf16.mxu0 0
    %476 = vmatpush1.bf16.msra.mxu0 0
    %477 = vmatprep.subr.bf16.mxu0 0
    %478 = vmatpush1.bf16.msra.mxu0 0
    %479 = vmatprep.subr.bf16.mxu0 0
    %480 = vmatpush1.bf16.msra.mxu0 0
    %481 = vmatprep.mubr.bf16.mxu0 0
    %482 = vmatmul.mubr.bf16.gmra.mrb[0].mxu0 %v377
    %v483 = vpop.f32.mrb[0].mxu0
    %v484 = vadd.f32 %v399, %v483
    %v485 = vpop.f32.mrb[0].mxu0
    %v486 = vpop.f32.mrb[0].mxu0
    %v487 = vadd.f32 %v399, %v486
    %v488 = vpop.f32.mrb[0].mxu0
    %489 = vdwg.mxu0
    %v490 = vpack.c.bf16 %v487, %v484
    %v492 = vunpack.c.l.b16 %v490
    %v493 = vunpack.c.h.b16 %v490
    %v494 = vpack.c.b16 %v492, %v492
    %v495 = vpack.c.b16 %v493, %v493
    %vm498 = vcmask 125952
    %499 = vst.msk [vmem:[#allocation7] sm:$0xf] %vm498, %v494
    %500 = vst.msk [vmem:[#allocation7 + $0x4] sm:$0xf] %vm498, %v495
    // Predicated region
    $region46: #{_encoder_call.1} parent=1 // pred_check
      _
    $region47: #{_encoder_call.1} parent=1 // pred_check_branch
      %502 = sbr.rel (0) target = $region49
    $region48: #{_encoder_call.1} parent=1 // pred_region
      %s504 = ssub.s32 128, 128
      %505 = vsyncadd [#allocation4], %s504
      %s506 = sshll.u32 [#allocation7], 4
      %s507 = int_to_ptr.vmem [resolvable:$true] %s506
      %512 = dma.vmem_to_hbm [thread:$0]  %s507, 128, %s9, [#allocation4], 64, 64, 4
    $region49: #{_encoder_call.1} parent=1 // pred_fallthru
      _
    // Predicated region
    $region50: #{_encoder_call.1} parent=1 // pred_check
      _
    $region51: #{_encoder_call.1} parent=1 // pred_check_branch
      %514 = sbr.rel (0) target = $region53
    $region52: #{_encoder_call.1} parent=1 // pred_region
      %515 = dma.done [#allocation4], 128
    $region53: #{_encoder_call.1} parent=1 // pred_fallthru
      _
    %516 = vsyncpa [#allocation3], 1
    %517 = vsyncpa [#allocation6], 1
    %518 = vsyncpa [#allocation4], 1

</llo_original>
